<compile_context>
chip_gen: v6e
topology: v6e:2x2x1
jax: 0.10.0
libtpu: 0.0.40
codegen_flags: <defaults>
</compile_context>

<pallas_src>
import functools

import jax
import jax.numpy as jnp
import numpy as np
from jax import lax
from jax.experimental import pallas as pl
from jax.experimental.pallas import tpu as pltpu


def _lp_loss_kernel(feats_ref, fs_ref, labels_ref, labels_s_ref, npos_ref,
                    loss_ref, m_sc, l_sc, psum_sc, *, inv_temp, tail_valid):
    k = pl.program_id(1)
    nk = pl.num_programs(1)

    @pl.when(k == 0)
    def _():
        m_sc[...] = jnp.full_like(m_sc, -jnp.inf)
        l_sc[...] = jnp.zeros_like(l_sc)
        psum_sc[...] = jnp.zeros_like(psum_sc)

    # Native-dtype (bf16) MXU matmul contracting the last dims (no transpose
    # materialized); f32 accumulation.  1/temp applied to the f32 result so the
    # temperature scale is not quantized to bf16.
    sim = lax.dot_general(feats_ref[...], fs_ref[...],
                          dimension_numbers=(((1,), (1,)), ((), ())),
                          preferred_element_type=jnp.float32)          # (tb, ns_blk)
    sim = sim * jnp.float32(inv_temp)

    pos = labels_ref[...] == labels_s_ref[...]                         # (tb, ns_blk)

    def update(sim_blk, pos_blk):
        # Online logsumexp (running max m, running sum l) + running positive sum.
        m_new = jnp.maximum(m_sc[...], jnp.max(sim_blk, axis=-1, keepdims=True))
        alpha = jnp.exp(m_sc[...] - m_new)
        l_sc[...] = alpha * l_sc[...] + jnp.sum(jnp.exp(sim_blk - m_new),
                                                axis=-1, keepdims=True)
        m_sc[...] = m_new
        psum_sc[...] += jnp.sum(jnp.where(pos_blk, sim_blk, 0.0),
                                axis=-1, keepdims=True)

    if tail_valid is None:
        # No lane padding anywhere: mask-free fast path on every step.
        update(sim, pos)
    else:
        # Lane padding exists only in the LAST Ns block: pay the mask only there.
        @pl.when(k < nk - 1)
        def _():
            update(sim, pos)

        @pl.when(k == nk - 1)
        def _():
            col = lax.broadcasted_iota(jnp.int32, sim.shape, 1)
            valid = col < tail_valid                                   # static threshold
            update(jnp.where(valid, sim, -1e30),
                   jnp.logical_and(pos, valid))

    @pl.when(k == nk - 1)
    def _():
        lse = m_sc[...] + jnp.log(l_sc[...])                           # (tb, 1)
        n_pos = npos_ref[...]
        # Guard rows with no positive support (the PyTorch original would crash);
        # such rows contribute only their logsumexp.
        pos_mean = jnp.where(n_pos > 0.0,
                             psum_sc[...] / jnp.maximum(n_pos, 1.0),
                             0.0)
        loss_ref[...] = lse - pos_mean                                 # per-row loss


def _vmem_budget_bytes():
    """Per-generation VMEM budget (75% of physical, capped)."""
    try:
        cap = int(getattr(pltpu.get_tpu_info(), "vmem_capacity_bytes",
                          64 * 1024 * 1024))
    except Exception:
        cap = 64 * 1024 * 1024
    # v7x: 64 MiB -> ~48 MiB budget; v5e/v6e: 128 MiB -> capped at 112 MiB.
    return min(int(cap * 0.75), 112 * 1024 * 1024)


def lp_loss_pallas(feats, feats_s, labels, labels_s, *, temp, topk,
                   tb=None, ns_blk=None, mxu_dtype=jnp.bfloat16,
                   vmem_limit_bytes=None):
    B, C = feats.shape
    B_s = feats_s.shape[0]
    C_s = feats_s.shape[-1]
    fs = feats_s.reshape(B_s * topk, C_s)                 # (Ns, C) glue reshape
    Ns = fs.shape[0]

    # Lane-pad the support count to a multiple of 128 (lane-dense sim / reductions).
    Ns_pad = ((Ns + 127) // 128) * 128
    pad = Ns_pad - Ns
    if pad:
        fs = jnp.pad(fs, ((0, pad), (0, 0)))
    labels_s2 = jnp.pad(labels_s.reshape(1, Ns).astype(jnp.int32),
                        ((0, 0), (0, pad)),
                        constant_values=np.iinfo(np.int32).min)
    labels2 = labels.reshape(B, 1).astype(jnp.int32)

    # n_pos per row precomputed here (tiny XLA reduce) -> removes one full
    # (tb, ns_blk) cross-lane reduction per grid step inside the kernel.
    n_pos = jnp.sum((labels.astype(jnp.int32)[:, None] ==
                     labels_s.astype(jnp.int32)[None, :]).astype(jnp.float32),
                    axis=-1, keepdims=True)                            # (B, 1)

    # Feed the MXU bf16 (native rate, halves fs HBM bytes); f32 accumulation.
    feats_m = feats.astype(mxu_dtype)
    fs_m = fs.astype(mxu_dtype)
    dt_bytes = jnp.dtype(mxu_dtype).itemsize

    if vmem_limit_bytes is None:
        vmem_limit_bytes = _vmem_budget_bytes()

    # Batch tile: as large as possible (<=512) while dividing B, so arithmetic
    # intensity w.r.t. the streamed fs bytes is high; keep B//tb >= 2 for large B
    # so the "parallel" axis can shard across two TensorCores (v7x megacore).
    if tb is None:
        if B <= 512:
            tb = B
        else:
            tb = next((c for c in (512, 384, 256, 128, 64, 32, 16, 8)
                       if B % c == 0), B)
    assert B % tb == 0

    # Support block: make fs fully VMEM-resident if the budget allows (block index
    # stays (0, k)=(0,0) across steps -> Pallas skips the re-DMA), otherwise the
    # largest lane-multiple block that fits.
    def _fits(tb_, nb_):
        fs_bytes = 2 * nb_ * C_s * dt_bytes            # double-buffered fs block
        q_bytes = 2 * tb_ * C * dt_bytes               # double-buffered query tile
        sim_bytes = 3 * tb_ * nb_ * 4                  # sim + exp intermediates (f32)
        misc = 8 * tb_ * 4 + 4 * nb_ * 4 + (1 << 20)   # scratch, labels, slack
        return fs_bytes + q_bytes + sim_bytes + misc <= vmem_limit_bytes

    if ns_blk is None:
        candidates = [Ns_pad] + [c for c in (8192, 4096, 2048, 1024, 512, 256, 128)
                                 if c < Ns_pad and Ns_pad % c == 0]
        ns_blk = next((c for c in candidates if _fits(tb, c)), 128)
    assert Ns_pad % ns_blk == 0

    nk = Ns_pad // ns_blk
    # Padding columns only exist in the last Ns block; static valid-column count.
    tail_valid = None if pad == 0 else (Ns - (nk - 1) * ns_blk)

    kernel = functools.partial(_lp_loss_kernel,
                               inv_temp=float(1.0 / temp),
                               tail_valid=tail_valid)

    per_row = pl.pallas_call(
        kernel,
        out_shape=jax.ShapeDtypeStruct((B, 1), jnp.float32),
        grid_spec=pltpu.PrefetchScalarGridSpec(
            num_scalar_prefetch=0,
            grid=(B // tb, nk),                         # reduction (Ns) axis last
            in_specs=[
                pl.BlockSpec((tb, C), lambda i, k: (i, 0)),        # query feats tile
                pl.BlockSpec((ns_blk, C_s), lambda i, k: (k, 0)),  # support feats block
                pl.BlockSpec((tb, 1), lambda i, k: (i, 0)),        # query labels
                pl.BlockSpec((1, ns_blk), lambda i, k: (0, k)),    # support labels
                pl.BlockSpec((tb, 1), lambda i, k: (i, 0)),        # per-row n_pos
            ],
            out_specs=pl.BlockSpec((tb, 1), lambda i, k: (i, 0)),  # per-row loss
            scratch_shapes=[pltpu.VMEM((tb, 1), jnp.float32)] * 3,  # m, l, pos_sum
        ),
        compiler_params=pltpu.CompilerParams(
            dimension_semantics=("parallel", "arbitrary"),
            vmem_limit_bytes=vmem_limit_bytes),
    )(feats_m, fs_m, labels2, labels_s2, n_pos)

    return jnp.sum(per_row) / B


def lp_loss_ref(feats, feats_s, labels, labels_s, *, temp, topk, mm_dtype=None):
    """Pure-JAX reference mirroring the PyTorch forward.

    mm_dtype=None  -> exact f32 semantics of the original module.
    mm_dtype=bf16  -> same matmul precision as the kernel (for tight comparison).
    """
    B_s = feats_s.shape[0]
    C_s = feats_s.shape[-1]
    fs = feats_s.reshape(B_s * topk, C_s)
    if mm_dtype is None:
        sim = feats @ fs.T / temp
    else:
        sim = jnp.dot(feats.astype(mm_dtype), fs.astype(mm_dtype).T,
                      preferred_element_type=jnp.float32) / temp
    logp = jax.nn.log_softmax(sim, axis=-1)
    pos = (labels[:, None] == labels_s[None, :]).astype(jnp.float32)
    n_pos = pos.sum(-1)
    loss_i = -(logp * pos).sum(-1) / n_pos
    return loss_i.mean()


if __name__ == "__main__":
    # args-like constants (deterministic, in-script)
    intra_topk = 2
    temp_lp_loss = 0.1

    B, C = 8, 32          # query features
    B_s = 4               # support instances; Ns = B_s * topk = 8

    key = jax.random.PRNGKey(0)
    k1, k2, k3 = jax.random.split(key, 3)
    feats = jax.random.normal(k1, (B, C), dtype=jnp.float32)
    feats_s = jax.random.normal(k2, (B_s, intra_topk, C), dtype=jnp.float32)
    # support labels: one label per support instance, repeated topk times
    labels_s = jnp.repeat(jnp.arange(B_s, dtype=jnp.int32), intra_topk)   # (Ns,)
    # query labels drawn from the support label set so every row has positives
    labels = jax.random.randint(k3, (B,), 0, B_s, dtype=jnp.int32)

    loss = lp_loss_pallas(feats, feats_s, labels, labels_s,
                          temp=temp_lp_loss, topk=intra_topk)
    loss = jax.block_until_ready(loss)

    # Tight check against a reference with matching (bf16) matmul precision.
    ref_bf16 = lp_loss_ref(feats, feats_s, labels, labels_s,
                           temp=temp_lp_loss, topk=intra_topk,
                           mm_dtype=jnp.bfloat16)
    np.testing.assert_allclose(np.asarray(loss), np.asarray(ref_bf16),
                               rtol=2e-3, atol=2e-3)

    # Looser sanity check against the exact f32 semantics of the PyTorch module.
    ref_f32 = lp_loss_ref(feats, feats_s, labels, labels_s,
                          temp=temp_lp_loss, topk=intra_topk)
    np.testing.assert_allclose(np.asarray(loss), np.asarray(ref_f32),
                               rtol=5e-2, atol=5e-1)
    print("KERNEL_OK")
</pallas_src>

<mosaic_0001>
module attributes {stable_mosaic.version = 11 : i64} {
  func.func @_lp_loss_kernel(%arg0: i32, %arg1: i32, %arg2: memref<8x32xbf16, #tpu.memory_space<vmem>>, %arg3: memref<128x32xbf16, #tpu.memory_space<vmem>>, %arg4: memref<8x1xi32, #tpu.memory_space<vmem>>, %arg5: memref<1x128xi32, #tpu.memory_space<vmem>>, %arg6: memref<8x1xf32, #tpu.memory_space<vmem>>, %arg7: memref<8x1xf32, #tpu.memory_space<vmem>>, %arg8: memref<8x1xf32, #tpu.memory_space<vmem>>, %arg9: memref<8x1xf32, #tpu.memory_space<vmem>>, %arg10: memref<8x1xf32, #tpu.memory_space<vmem>>) attributes {dimension_semantics = [#tpu.dimension_semantics<parallel>, #tpu.dimension_semantics<arbitrary>], iteration_bounds = array<i64: 1, 1>, scalar_prefetch = 0 : i64, scratch_operands = 3 : i64, tpu.core_type = #tpu.core_type<tc>, window_params = [{transform_indices = @transform_0, window_bounds = array<i64: 8, 32>}, {transform_indices = @transform_1, window_bounds = array<i64: 128, 32>}, {transform_indices = @transform_2, window_bounds = array<i64: 8, 1>}, {transform_indices = @transform_3, window_bounds = array<i64: 1, 128>}, {transform_indices = @transform_4, window_bounds = array<i64: 8, 1>}, {transform_indices = @transform_5, window_bounds = array<i64: 8, 1>}]} {
    %c0_i32 = arith.constant 0 : i32
    %0 = arith.cmpi eq, %arg1, %c0_i32 : i32
    %1 = arith.extui %0 : i1 to i32
    %c0_i32_0 = arith.constant 0 : i32
    %2 = arith.cmpi ne, %1, %c0_i32_0 : i32
    scf.if %2 {
      %cst_15 = arith.constant 0xFF800000 : f32
      %22 = vector.broadcast %cst_15 : f32 to vector<8x1xf32>
      %c0_16 = arith.constant 0 : index
      %c0_17 = arith.constant 0 : index
      %23 = vector.load %arg8[%c0_16, %c0_17] : memref<8x1xf32, #tpu.memory_space<vmem>>, vector<8x1xf32>
      tpu.vector_store %arg8[%c0_16, %c0_17], %22 {strides = array<i32>} : memref<8x1xf32, #tpu.memory_space<vmem>>, vector<8x1xf32>,
      %cst_18 = arith.constant 0.000000e+00 : f32
      %24 = vector.broadcast %cst_18 : f32 to vector<8x1xf32>
      %c0_19 = arith.constant 0 : index
      %c0_20 = arith.constant 0 : index
      %25 = vector.load %arg9[%c0_19, %c0_20] : memref<8x1xf32, #tpu.memory_space<vmem>>, vector<8x1xf32>
      tpu.vector_store %arg9[%c0_19, %c0_20], %24 {strides = array<i32>} : memref<8x1xf32, #tpu.memory_space<vmem>>, vector<8x1xf32>,
      %cst_21 = arith.constant 0.000000e+00 : f32
      %26 = vector.broadcast %cst_21 : f32 to vector<8x1xf32>
      %c0_22 = arith.constant 0 : index
      %c0_23 = arith.constant 0 : index
      %27 = vector.load %arg10[%c0_22, %c0_23] : memref<8x1xf32, #tpu.memory_space<vmem>>, vector<8x1xf32>
      tpu.vector_store %arg10[%c0_22, %c0_23], %26 {strides = array<i32>} : memref<8x1xf32, #tpu.memory_space<vmem>>, vector<8x1xf32>,
    } else {
    }
    %c0 = arith.constant 0 : index
    %c0_1 = arith.constant 0 : index
    %3 = vector.load %arg2[%c0, %c0_1] : memref<8x32xbf16, #tpu.memory_space<vmem>>, vector<8x32xbf16>
    %c0_2 = arith.constant 0 : index
    %c0_3 = arith.constant 0 : index
    %4 = vector.load %arg3[%c0_2, %c0_3] : memref<128x32xbf16, #tpu.memory_space<vmem>>, vector<128x32xbf16>
    %cst = arith.constant dense<0.000000e+00> : vector<8x128xf32>
    %5 = tpu.matmul %3, %4, %cst {dimension_numbers = #tpu.dot_dimension_numbers<[1], [1], [0], [0], [0, 0, 1, 0], [], []>} : vector<8x32xbf16>, vector<128x32xbf16>, vector<8x128xf32> -> vector<8x128xf32>
    %cst_4 = arith.constant 1.000000e+01 : f32
    %6 = vector.broadcast %cst_4 : f32 to vector<8x128xf32>
    %7 = arith.mulf %5, %6 : vector<8x128xf32>
    %c0_5 = arith.constant 0 : index
    %c0_6 = arith.constant 0 : index
    %8 = vector.load %arg4[%c0_5, %c0_6] : memref<8x1xi32, #tpu.memory_space<vmem>>, vector<8x1xi32>
    %c0_7 = arith.constant 0 : index
    %c0_8 = arith.constant 0 : index
    %9 = vector.load %arg5[%c0_7, %c0_8] : memref<1x128xi32, #tpu.memory_space<vmem>>, vector<1x128xi32>
    %10 = vector.broadcast %8 : vector<8x1xi32> to vector<8x128xi32>
    %11 = vector.broadcast %9 : vector<1x128xi32> to vector<8x128xi32>
    %12 = arith.cmpi eq, %10, %11 : vector<8x128xi32>
    %c0_i32_9 = arith.constant 0 : i32
    %13 = arith.cmpi slt, %arg1, %c0_i32_9 : i32
    %14 = arith.extui %13 : i1 to i32
    %c0_i32_10 = arith.constant 0 : i32
    %15 = arith.cmpi ne, %14, %c0_i32_10 : i32
    scf.if %15 {
      %c0_15 = arith.constant 0 : index
      %c0_16 = arith.constant 0 : index
      %22 = vector.load %arg8[%c0_15, %c0_16] : memref<8x1xf32, #tpu.memory_space<vmem>>, vector<8x1xf32>
      %cst_17 = arith.constant dense<0xFF800000> : vector<8xf32>
      %23 = vector.multi_reduction <maximumf>, %7, %cst_17 [1] : vector<8x128xf32> to vector<8xf32>
      %24 = vector.shape_cast %23 : vector<8xf32> to vector<8x1xf32>
      %25 = arith.maximumf %22, %24 : vector<8x1xf32>
      %c0_18 = arith.constant 0 : index
      %c0_19 = arith.constant 0 : index
      %26 = vector.load %arg8[%c0_18, %c0_19] : memref<8x1xf32, #tpu.memory_space<vmem>>, vector<8x1xf32>
      %27 = arith.subf %26, %25 : vector<8x1xf32>
      %28 = math.exp %27 : vector<8x1xf32>
      %c0_20 = arith.constant 0 : index
      %c0_21 = arith.constant 0 : index
      %29 = vector.load %arg9[%c0_20, %c0_21] : memref<8x1xf32, #tpu.memory_space<vmem>>, vector<8x1xf32>
      %30 = arith.mulf %28, %29 : vector<8x1xf32>
      %31 = vector.broadcast %25 : vector<8x1xf32> to vector<8x128xf32>
      %32 = arith.subf %7, %31 : vector<8x128xf32>
      %33 = math.exp %32 : vector<8x128xf32>
      %cst_22 = arith.constant dense<0.000000e+00> : vector<8xf32>
      %34 = vector.multi_reduction <add>, %33, %cst_22 [1] : vector<8x128xf32> to vector<8xf32>
      %35 = vector.shape_cast %34 : vector<8xf32> to vector<8x1xf32>
      %36 = arith.addf %30, %35 : vector<8x1xf32>
      %c0_23 = arith.constant 0 : index
      %c0_24 = arith.constant 0 : index
      %37 = vector.load %arg9[%c0_23, %c0_24] : memref<8x1xf32, #tpu.memory_space<vmem>>, vector<8x1xf32>
      tpu.vector_store %arg9[%c0_23, %c0_24], %36 {strides = array<i32>} : memref<8x1xf32, #tpu.memory_space<vmem>>, vector<8x1xf32>,
      %c0_25 = arith.constant 0 : index
      %c0_26 = arith.constant 0 : index
      %38 = vector.load %arg8[%c0_25, %c0_26] : memref<8x1xf32, #tpu.memory_space<vmem>>, vector<8x1xf32>
      tpu.vector_store %arg8[%c0_25, %c0_26], %25 {strides = array<i32>} : memref<8x1xf32, #tpu.memory_space<vmem>>, vector<8x1xf32>,
      %c0_27 = arith.constant 0 : index
      %c0_28 = arith.constant 0 : index
      %39 = vector.load %arg10[%c0_27, %c0_28] : memref<8x1xf32, #tpu.memory_space<vmem>>, vector<8x1xf32>
      %cst_29 = arith.constant 0.000000e+00 : f32
      %40 = vector.broadcast %cst_29 : f32 to vector<8x128xf32>
      %41 = arith.select %12, %7, %40 : vector<8x128xi1>, vector<8x128xf32>
      %cst_30 = arith.constant dense<0.000000e+00> : vector<8xf32>
      %42 = vector.multi_reduction <add>, %41, %cst_30 [1] : vector<8x128xf32> to vector<8xf32>
      %43 = vector.shape_cast %42 : vector<8xf32> to vector<8x1xf32>
      %44 = arith.addf %39, %43 : vector<8x1xf32>
      %c0_31 = arith.constant 0 : index
      %c0_32 = arith.constant 0 : index
      %45 = vector.load %arg10[%c0_31, %c0_32] : memref<8x1xf32, #tpu.memory_space<vmem>>, vector<8x1xf32>
      tpu.vector_store %arg10[%c0_31, %c0_32], %44 {strides = array<i32>} : memref<8x1xf32, #tpu.memory_space<vmem>>, vector<8x1xf32>,
    } else {
    }
    %c0_i32_11 = arith.constant 0 : i32
    %16 = arith.cmpi eq, %arg1, %c0_i32_11 : i32
    %17 = arith.extui %16 : i1 to i32
    %c0_i32_12 = arith.constant 0 : i32
    %18 = arith.cmpi ne, %17, %c0_i32_12 : i32
    scf.if %18 {
      %22 = tpu.iota {dimensions = array<i32: 1>} : vector<8x128xi32>
      %c8_i32 = arith.constant 8 : i32
      %23 = vector.broadcast %c8_i32 : i32 to vector<8x128xi32>
      %24 = arith.cmpi slt, %22, %23 : vector<8x128xi32>
      %cst_15 = arith.constant -1.000000e+30 : f32
      %25 = vector.broadcast %cst_15 : f32 to vector<8x128xf32>
      %26 = arith.select %24, %7, %25 : vector<8x128xi1>, vector<8x128xf32>
      %27 = arith.andi %12, %24 : vector<8x128xi1>
      %c0_16 = arith.constant 0 : index
      %c0_17 = arith.constant 0 : index
      %28 = vector.load %arg8[%c0_16, %c0_17] : memref<8x1xf32, #tpu.memory_space<vmem>>, vector<8x1xf32>
      %cst_18 = arith.constant dense<0xFF800000> : vector<8xf32>
      %29 = vector.multi_reduction <maximumf>, %26, %cst_18 [1] : vector<8x128xf32> to vector<8xf32>
      %30 = vector.shape_cast %29 : vector<8xf32> to vector<8x1xf32>
      %31 = arith.maximumf %28, %30 : vector<8x1xf32>
      %c0_19 = arith.constant 0 : index
      %c0_20 = arith.constant 0 : index
      %32 = vector.load %arg8[%c0_19, %c0_20] : memref<8x1xf32, #tpu.memory_space<vmem>>, vector<8x1xf32>
      %33 = arith.subf %32, %31 : vector<8x1xf32>
      %34 = math.exp %33 : vector<8x1xf32>
      %c0_21 = arith.constant 0 : index
      %c0_22 = arith.constant 0 : index
      %35 = vector.load %arg9[%c0_21, %c0_22] : memref<8x1xf32, #tpu.memory_space<vmem>>, vector<8x1xf32>
      %36 = arith.mulf %34, %35 : vector<8x1xf32>
      %37 = vector.broadcast %31 : vector<8x1xf32> to vector<8x128xf32>
      %38 = arith.subf %26, %37 : vector<8x128xf32>
      %39 = math.exp %38 : vector<8x128xf32>
      %cst_23 = arith.constant dense<0.000000e+00> : vector<8xf32>
      %40 = vector.multi_reduction <add>, %39, %cst_23 [1] : vector<8x128xf32> to vector<8xf32>
      %41 = vector.shape_cast %40 : vector<8xf32> to vector<8x1xf32>
      %42 = arith.addf %36, %41 : vector<8x1xf32>
      %c0_24 = arith.constant 0 : index
      %c0_25 = arith.constant 0 : index
      %43 = vector.load %arg9[%c0_24, %c0_25] : memref<8x1xf32, #tpu.memory_space<vmem>>, vector<8x1xf32>
      tpu.vector_store %arg9[%c0_24, %c0_25], %42 {strides = array<i32>} : memref<8x1xf32, #tpu.memory_space<vmem>>, vector<8x1xf32>,
      %c0_26 = arith.constant 0 : index
      %c0_27 = arith.constant 0 : index
      %44 = vector.load %arg8[%c0_26, %c0_27] : memref<8x1xf32, #tpu.memory_space<vmem>>, vector<8x1xf32>
      tpu.vector_store %arg8[%c0_26, %c0_27], %31 {strides = array<i32>} : memref<8x1xf32, #tpu.memory_space<vmem>>, vector<8x1xf32>,
      %c0_28 = arith.constant 0 : index
      %c0_29 = arith.constant 0 : index
      %45 = vector.load %arg10[%c0_28, %c0_29] : memref<8x1xf32, #tpu.memory_space<vmem>>, vector<8x1xf32>
      %cst_30 = arith.constant 0.000000e+00 : f32
      %46 = vector.broadcast %cst_30 : f32 to vector<8x128xf32>
      %47 = arith.select %27, %26, %46 : vector<8x128xi1>, vector<8x128xf32>
      %cst_31 = arith.constant dense<0.000000e+00> : vector<8xf32>
      %48 = vector.multi_reduction <add>, %47, %cst_31 [1] : vector<8x128xf32> to vector<8xf32>
      %49 = vector.shape_cast %48 : vector<8xf32> to vector<8x1xf32>
      %50 = arith.addf %45, %49 : vector<8x1xf32>
      %c0_32 = arith.constant 0 : index
      %c0_33 = arith.constant 0 : index
      %51 = vector.load %arg10[%c0_32, %c0_33] : memref<8x1xf32, #tpu.memory_space<vmem>>, vector<8x1xf32>
      tpu.vector_store %arg10[%c0_32, %c0_33], %50 {strides = array<i32>} : memref<8x1xf32, #tpu.memory_space<vmem>>, vector<8x1xf32>,
    } else {
    }
    %c0_i32_13 = arith.constant 0 : i32
    %19 = arith.cmpi eq, %arg1, %c0_i32_13 : i32
    %20 = arith.extui %19 : i1 to i32
    %c0_i32_14 = arith.constant 0 : i32
    %21 = arith.cmpi ne, %20, %c0_i32_14 : i32
    scf.if %21 {
      %c0_15 = arith.constant 0 : index
      %c0_16 = arith.constant 0 : index
      %22 = vector.load %arg8[%c0_15, %c0_16] : memref<8x1xf32, #tpu.memory_space<vmem>>, vector<8x1xf32>
      %c0_17 = arith.constant 0 : index
      %c0_18 = arith.constant 0 : index
      %23 = vector.load %arg9[%c0_17, %c0_18] : memref<8x1xf32, #tpu.memory_space<vmem>>, vector<8x1xf32>
      %24 = math.log %23 : vector<8x1xf32>
      %25 = arith.addf %22, %24 : vector<8x1xf32>
      %c0_19 = arith.constant 0 : index
      %c0_20 = arith.constant 0 : index
      %26 = vector.load %arg6[%c0_19, %c0_20] : memref<8x1xf32, #tpu.memory_space<vmem>>, vector<8x1xf32>
      %cst_21 = arith.constant 0.000000e+00 : f32
      %27 = vector.broadcast %cst_21 : f32 to vector<8x1xf32>
      %28 = arith.cmpf ogt, %26, %27 : vector<8x1xf32>
      %c0_22 = arith.constant 0 : index
      %c0_23 = arith.constant 0 : index
      %29 = vector.load %arg10[%c0_22, %c0_23] : memref<8x1xf32, #tpu.memory_space<vmem>>, vector<8x1xf32>
      %cst_24 = arith.constant 1.000000e+00 : f32
      %30 = vector.broadcast %cst_24 : f32 to vector<8x1xf32>
      %31 = arith.maximumf %26, %30 : vector<8x1xf32>
      %32 = arith.divf %29, %31 : vector<8x1xf32>
      %cst_25 = arith.constant 0.000000e+00 : f32
      %33 = vector.broadcast %cst_25 : f32 to vector<8x1xf32>
      %34 = arith.select %28, %32, %33 : vector<8x1xi1>, vector<8x1xf32>
      %35 = arith.subf %25, %34 : vector<8x1xf32>
      %c0_26 = arith.constant 0 : index
      %c0_27 = arith.constant 0 : index
      %36 = vector.load %arg7[%c0_26, %c0_27] : memref<8x1xf32, #tpu.memory_space<vmem>>, vector<8x1xf32>
      tpu.vector_store %arg7[%c0_26, %c0_27], %35 {strides = array<i32>} : memref<8x1xf32, #tpu.memory_space<vmem>>, vector<8x1xf32>,
    } else {
    }
    return
  }
  func.func @transform_0(%arg0: i32, %arg1: i32) -> (i32, i32) {
    %c0_i32 = arith.constant 0 : i32
    %c0_i32_0 = arith.constant 0 : i32
    return %arg0, %c0_i32 : i32, i32
  }
  func.func @transform_1(%arg0: i32, %arg1: i32) -> (i32, i32) {
    %c0_i32 = arith.constant 0 : i32
    %c0_i32_0 = arith.constant 0 : i32
    return %arg1, %c0_i32 : i32, i32
  }
  func.func @transform_2(%arg0: i32, %arg1: i32) -> (i32, i32) {
    %c0_i32 = arith.constant 0 : i32
    %c0_i32_0 = arith.constant 0 : i32
    return %arg0, %c0_i32 : i32, i32
  }
  func.func @transform_3(%arg0: i32, %arg1: i32) -> (i32, i32) {
    %c0_i32 = arith.constant 0 : i32
    %c0_i32_0 = arith.constant 0 : i32
    return %c0_i32, %arg1 : i32, i32
  }
  func.func @transform_4(%arg0: i32, %arg1: i32) -> (i32, i32) {
    %c0_i32 = arith.constant 0 : i32
    %c0_i32_0 = arith.constant 0 : i32
    return %arg0, %c0_i32 : i32, i32
  }
  func.func @transform_5(%arg0: i32, %arg1: i32) -> (i32, i32) {
    %c0_i32 = arith.constant 0 : i32
    %c0_i32_0 = arith.constant 0 : i32
    return %arg0, %c0_i32 : i32, i32
  }
}

</mosaic_0001>

<llo_original>
// kernel: tpu_custom_call.1
$region0: #{tpu_custom_call.1}
  #allocation0 [shape = 'u32[]', space=smem, size = 0x4, offset = 0x4, fixed_abs, tag = 'smem constant byte address 0x4 - core index']
  #allocation1 [shape = 'u32[144,128]{1,0:T(1,128)}', space=vmem, size = 0x12000, scoped, tag = 'internal scratch']
  #allocation2 [shape = 'f32[8,1]{1,0:T(8,128)}', space=vmem, size = 0x1000, scoped, tag = 'scratch operand']
  #allocation3 [shape = 'f32[8,1]{1,0:T(8,128)}', space=vmem, size = 0x1000, scoped, tag = 'scratch operand']
  #allocation4 [shape = 'f32[8,1]{1,0:T(8,128)}', space=vmem, size = 0x1000, scoped, tag = 'scratch operand']
  %s0 = inlined_call_operand.vmem [shape: bf16[8,32], index: 0, kind: input, shape index: {}]
  %s1 = inlined_call_operand.vmem [shape: bf16[128,32], index: 1, kind: input, shape index: {}]
  %s2 = inlined_call_operand.vmem [shape: s32[8,1], index: 2, kind: input, shape index: {}]
  %s3 = inlined_call_operand.vmem [shape: s32[1,128], index: 3, kind: input, shape index: {}]
  %s4 = inlined_call_operand.vmem [shape: f32[8,1], index: 4, kind: input, shape index: {}]
  %s5 = inlined_call_operand.vmem [shape: f32[8,1], index: 5, kind: output, shape index: {}]
  %s6 = sld [smem:[#allocation0]]
  $region42: #{tpu_custom_call.1} parent=0
    _
  %s8 = ssub.s32 1, %s6
  %s9 = scalar_select 0, %s8, %s6
  // Predicated region
  $region2: #{tpu_custom_call.1} parent=0 // pred_check
    _
  $region3: #{tpu_custom_call.1} parent=0 // pred_check_branch
    %11 = sbr.rel (0) target = $region5
  $region4: #{tpu_custom_call.1} parent=0 // pred_region
    _
  $region5: #{tpu_custom_call.1} parent=0 // pred_fallthru
    _
  // Predicated region
  $region6: #{tpu_custom_call.1} parent=0 // pred_check
    _
  $region7: #{tpu_custom_call.1} parent=0 // pred_check_branch
    %13 = sbr.rel (0) target = $region9
  $region8: #{tpu_custom_call.1} parent=0 // pred_region
    _
  $region9: #{tpu_custom_call.1} parent=0 // pred_fallthru
    _
  // Predicated region
  $region10: #{tpu_custom_call.1} parent=0 // pred_check
    _
  $region11: #{tpu_custom_call.1} parent=0 // pred_check_branch
    %15 = sbr.rel (0) target = $region13
  $region12: #{tpu_custom_call.1} parent=0 // pred_region
    _
  $region13: #{tpu_custom_call.1} parent=0 // pred_fallthru
    _
  // Predicated region
  $region14: #{tpu_custom_call.1} parent=0 // pred_check
    _
  $region15: #{tpu_custom_call.1} parent=0 // pred_check_branch
    %17 = sbr.rel (0) target = $region17
  $region16: #{tpu_custom_call.1} parent=0 // pred_region
    _
  $region17: #{tpu_custom_call.1} parent=0 // pred_fallthru
    _
  // Predicated region
  $region18: #{tpu_custom_call.1} parent=0 // pred_check
    _
  $region19: #{tpu_custom_call.1} parent=0 // pred_check_branch
    %19 = sbr.rel (0) target = $region21
  $region20: #{tpu_custom_call.1} parent=0 // pred_region
    _
  $region21: #{tpu_custom_call.1} parent=0 // pred_fallthru
    _
  %p21 = scmp.eq.s32.totalorder 0, 0
  // Predicated region
  $region22: #{tpu_custom_call.1} parent=0 // pred_check
    %p22 = pneg %p21
  $region23: #{tpu_custom_call.1} parent=0 // pred_check_branch
    %24 = sbr.rel (%p22) target = $region25
  $region24: #{tpu_custom_call.1} parent=0 // pred_region
    %vm25 = vcmask 7168
    %26 = vst.msk [vmem:[#allocation2] sm:$0xff] %vm25, -inf
    %27 = vst.msk [vmem:[#allocation3] sm:$0xff] %vm25, 0.0
    %28 = vst.msk [vmem:[#allocation4] sm:$0xff] %vm25, 0.0
  $region25: #{tpu_custom_call.1} parent=0 // pred_fallthru
    _
  %v29 = vld [vmem:[%s0] sm:$0xf]
  %v30 = vld [vmem:[%s1] sm:$0xf]
  %v31 = vld [vmem:[%s1 + $0x4] sm:$0xf]
  %v32 = vld [vmem:[%s1 + $0x8] sm:$0xf]
  %v33 = vld [vmem:[%s1 + $0xc] sm:$0xf]
  %v34 = vld [vmem:[%s1 + $0x10] sm:$0xf]
  %v35 = vld [vmem:[%s1 + $0x14] sm:$0xf]
  %v36 = vld [vmem:[%s1 + $0x18] sm:$0xf]
  %v37 = vld [vmem:[%s1 + $0x1c] sm:$0xf]
  %v38 = vld [vmem:[%s1 + $0x20] sm:$0xf]
  %v39 = vld [vmem:[%s1 + $0x24] sm:$0xf]
  %v40 = vld [vmem:[%s1 + $0x28] sm:$0xf]
  %v41 = vld [vmem:[%s1 + $0x2c] sm:$0xf]
  %v42 = vld [vmem:[%s1 + $0x30] sm:$0xf]
  %v43 = vld [vmem:[%s1 + $0x34] sm:$0xf]
  %v44 = vld [vmem:[%s1 + $0x38] sm:$0xf]
  %v45 = vld [vmem:[%s1 + $0x3c] sm:$0xf]
  %v62 = vunpack.c.l.b16 %v30
  %v63 = vunpack.c.l.b16 %v31
  %v64 = vunpack.c.l.b16 %v32
  %v65 = vunpack.c.l.b16 %v33
  %v66 = vunpack.c.l.b16 %v34
  %v67 = vunpack.c.l.b16 %v35
  %v68 = vunpack.c.l.b16 %v36
  %v69 = vunpack.c.l.b16 %v37
  %v70 = vunpack.c.l.b16 %v38
  %v71 = vunpack.c.l.b16 %v39
  %v72 = vunpack.c.l.b16 %v40
  %v73 = vunpack.c.l.b16 %v41
  %v74 = vunpack.c.l.b16 %v42
  %v75 = vunpack.c.l.b16 %v43
  %v76 = vunpack.c.l.b16 %v44
  %v77 = vunpack.c.l.b16 %v45
  %v78 = vpack.c.b16 %v63, %v62
  %v79 = vpack.c.b16 %v65, %v64
  %v80 = vpack.c.b16 %v67, %v66
  %v81 = vpack.c.b16 %v69, %v68
  %v82 = vpack.c.b16 %v71, %v70
  %v83 = vpack.c.b16 %v73, %v72
  %v84 = vpack.c.b16 %v75, %v74
  %v85 = vpack.c.b16 %v77, %v76
  %vm86 = vcmask 261120
  %v88 = vsel %vm86, %v29, 0
  %v91 = vsel %vm86, %v78, 0
  %v94 = vsel %vm86, %v79, 0
  %v97 = vsel %vm86, %v80, 0
  %v100 = vsel %vm86, %v81, 0
  %v103 = vsel %vm86, %v82, 0
  %v106 = vsel %vm86, %v83, 0
  %v109 = vsel %vm86, %v84, 0
  %v112 = vsel %vm86, %v85, 0
  %114 = vmatprep.subr.bf16.mxu0 0
  %115 = vmatpush1.bf16.xpose.msra.mxu0 %v112
  %116 = vmatprep.subr.bf16.mxu0 0
  %117 = vmatpush1.bf16.xpose.msra.mxu0 %v109
  %118 = vmatprep.subr.bf16.mxu0 0
  %119 = vmatpush1.bf16.xpose.msra.mxu0 %v106
  %120 = vmatprep.subr.bf16.mxu0 0
  %121 = vmatpush1.bf16.xpose.msra.mxu0 %v103
  %122 = vmatprep.subr.bf16.mxu0 0
  %123 = vmatpush1.bf16.xpose.msra.mxu0 %v100
  %124 = vmatprep.subr.bf16.mxu0 0
  %125 = vmatpush1.bf16.xpose.msra.mxu0 %v97
  %126 = vmatprep.subr.bf16.mxu0 0
  %127 = vmatpush1.bf16.xpose.msra.mxu0 %v94
  %128 = vmatprep.subr.bf16.mxu0 0
  %129 = vmatpush1.bf16.xpose.msra.mxu0 %v91
  %130 = vmatprep.subr.bf16.mxu0 0
  %131 = vmatpush2.bf16.xpose.msra.mxu0 0
  %132 = vmatprep.subr.bf16.mxu0 0
  %133 = vmatpush2.bf16.xpose.msra.mxu0 0
  %134 = vmatprep.subr.bf16.mxu0 0
  %135 = vmatpush2.bf16.xpose.msra.mxu0 0
  %136 = vmatprep.subr.bf16.mxu0 0
  %137 = vmatpush2.bf16.xpose.msra.mxu0 0
  %138 = vmatprep.subr.bf16.mxu0 0
  %139 = vmatpush2.bf16.xpose.msra.mxu0 0
  %140 = vmatprep.subr.bf16.mxu0 0
  %141 = vmatpush2.bf16.xpose.msra.mxu0 0
  %142 = vmatprep.subr.bf16.mxu0 0
  %143 = vmatpush2.bf16.xpose.msra.mxu0 0
  %144 = vmatprep.subr.bf16.mxu0 0
  %145 = vmatpush2.bf16.xpose.msra.mxu0 0
  %146 = vmatprep.mubr.bf16.mxu0 0
  %147 = vmatmul.mubr.bf16.gmra.mxu0 %v88
  %v148 = vpop.f32.mrf.mxu0
  %v149 = vadd.f32 0.0, %v148
  %v150 = vpop.f32.mrf.mxu0
  %v151 = vpop.f32.mrf.mxu0
  %v152 = vpop.f32.mrf.mxu0
  %153 = vdwg.mxu0
  %v154 = vmul.f32 %v149, 10.0
  %v155 = vld [vmem:[%s2] sm:$0xff]
  %v156 = vld [vmem:[%s3] sm:$0x1]
  %157 = vset.pattern.permute.xlu0 0
  %158 = vperm.xlu0 %157, %v155
  %v159 = vpop.permute.xlu0 %158
  %v160 = vlaneseq
  %v161 = vshrl.u32 %v160, 7
  %v162 = vsub.s32 0, %v161
  %v163 = vrot.slane %v156, %v162
  %vm164 = vcmp.eq.s32.totalorder %v159, %v163
  %p165 = scmp.lt.s32.totalorder 0, 0
  // Predicated region
  $region26: #{tpu_custom_call.1} parent=0 // pred_check
    %p166 = pneg %p165
  $region27: #{tpu_custom_call.1} parent=0 // pred_check_branch
    %168 = sbr.rel (%p166) target = $region29
  $region28: #{tpu_custom_call.1} parent=0 // pred_region
    %v169 = vld [vmem:[#allocation2] sm:$0xff]
    %170 = vmax.xlane.f32.xlu0 %v154
    %v171 = vpop.xlane.xlu0 %170
    %v172 = vmax.f32 %v169, %v171
    %v173 = vsub.f32 %v169, %v172
    %v174 = vmul.f32 %v173, 1.442695
    %v175 = vpow.pop %v174
    %v176 = vld [vmem:[#allocation3] sm:$0xff]
    %v177 = vmul.f32 %v175, %v176
    %179 = vset.pattern.permute.xlu0 0
    %180 = vperm.xlu0 %179, %v172
    %v181 = vpop.permute.xlu0 %180
    %v183 = vsub.f32 %v154, %v181
    %v184 = vmul.f32 %v183, 1.442695
    %v185 = vpow.pop %v184
    %186 = vadd.xlane.f32.xlu0 %v185
    %v187 = vpop.xlane.xlu0 %186
    %v188 = vadd.f32 %v177, %v187
    %vm189 = vcmask 7168
    %190 = vst.msk [vmem:[#allocation3] sm:$0xff] %vm189, %v188
    %191 = vst.msk [vmem:[#allocation2] sm:$0xff] %vm189, %v172
    %v192 = vld [vmem:[#allocation4] sm:$0xff]
    %v193 = vsel %vm164, %v154, 0.0
    %194 = vadd.xlane.f32.xlu0 %v193
    %v195 = vpop.xlane.xlu0 %194
    %v196 = vadd.f32 %v192, %v195
    %197 = vst.msk [vmem:[#allocation4] sm:$0xff] %vm189, %v196
  $region29: #{tpu_custom_call.1} parent=0 // pred_fallthru
    _
  // Predicated region
  $region30: #{tpu_custom_call.1} parent=0 // pred_check
    %p198 = pneg %p21
  $region31: #{tpu_custom_call.1} parent=0 // pred_check_branch
    %200 = sbr.rel (%p198) target = $region33
  $region32: #{tpu_custom_call.1} parent=0 // pred_region
    %v201 = vlaneseq
    %v202 = vand.u32 %v201, 127
    %vm203 = vcmp.lt.s32.totalorder %v202, 8
    %v204 = vsel %vm203, %v154, -1e+30
    %vm205 = vmand %vm164, %vm203
    %v206 = vld [vmem:[#allocation2] sm:$0xff]
    %207 = vmax.xlane.f32.xlu0 %v204
    %v208 = vpop.xlane.xlu0 %207
    %v209 = vmax.f32 %v206, %v208
    %v210 = vsub.f32 %v206, %v209
    %v211 = vmul.f32 %v210, 1.442695
    %v212 = vpow.pop %v211
    %v213 = vld [vmem:[#allocation3] sm:$0xff]
    %v214 = vmul.f32 %v212, %v213
    %216 = vset.pattern.permute.xlu0 0
    %217 = vperm.xlu0 %216, %v209
    %v218 = vpop.permute.xlu0 %217
    %v220 = vsub.f32 %v204, %v218
    %v221 = vmul.f32 %v220, 1.442695
    %v222 = vpow.pop %v221
    %223 = vadd.xlane.f32.xlu0 %v222
    %v224 = vpop.xlane.xlu0 %223
    %v225 = vadd.f32 %v214, %v224
    %vm226 = vcmask 7168
    %227 = vst.msk [vmem:[#allocation3] sm:$0xff] %vm226, %v225
    %228 = vst.msk [vmem:[#allocation2] sm:$0xff] %vm226, %v209
    %v229 = vld [vmem:[#allocation4] sm:$0xff]
    %v230 = vsel %vm205, %v204, 0.0
    %231 = vadd.xlane.f32.xlu0 %v230
    %v232 = vpop.xlane.xlu0 %231
    %v233 = vadd.f32 %v229, %v232
    %234 = vst.msk [vmem:[#allocation4] sm:$0xff] %vm226, %v233
    %v235 = vld [vmem:[#allocation2] sm:$0xff]
    %v236 = vld [vmem:[#allocation3] sm:$0xff]
    %v237 = vlog2.pop %v236
    %v238 = vmul.f32 %v237, 0.6931472
    %v239 = vadd.f32 %v235, %v238
    %v240 = vld [vmem:[%s4] sm:$0xff]
    %vm241 = vcmp.gt.f32.partialorder %v240, 0.0
    %v242 = vld [vmem:[#allocation4] sm:$0xff]
    %v243 = vmax.f32 %v240, 1.0
    %v244 = vrcp.pop %v243
    %v245 = vmul.f32 %v242, %v244
    %v246 = vsel %vm241, %v245, 0.0
    %v247 = vsub.f32 %v239, %v246
    %248 = vst.msk [vmem:[%s5] sm:$0xff] %vm226, %v247
  $region33: #{tpu_custom_call.1} parent=0 // pred_fallthru
    _
  // Predicated region
  $region34: #{tpu_custom_call.1} parent=0 // pred_check
    _
  $region35: #{tpu_custom_call.1} parent=0 // pred_check_branch
    %250 = sbr.rel (0) target = $region37
  $region36: #{tpu_custom_call.1} parent=0 // pred_region
    _
  $region37: #{tpu_custom_call.1} parent=0 // pred_fallthru
    _
  // Predicated region
  $region38: #{tpu_custom_call.1} parent=0 // pred_check
    _
  $region39: #{tpu_custom_call.1} parent=0 // pred_check_branch
    %252 = sbr.rel (0) target = $region41
  $region40: #{tpu_custom_call.1} parent=0 // pred_region
    _
  $region41: #{tpu_custom_call.1} parent=0 // pred_fallthru
    _

</llo_original>
